<compile_context>
chip_gen: v6e
topology: v6e:2x2x1
jax: 0.10.0
libtpu: 0.0.40
codegen_flags: <defaults>
</compile_context>

<pallas_src>
import jax
import jax.numpy as jnp
from jax import lax
from jax.experimental import pallas as pl
from jax.experimental.pallas import tpu as pltpu

K = 2    # cluster_number (hardcoded in the module's __init__)
D = 64   # dim            (hardcoded in the module's __init__)


def cluster_kernel(emb_ref, cent_ref, qT_ref):
    # emb_ref: (tile, D) rows-on-sublanes / features-on-lanes (f32 or bf16)
    # cent_ref: (K, D);  qT_ref: (K, tile) lane-dense soft assignments (q^T)
    e = emb_ref[...]                                    # keep HBM dtype for the MXU
    c = cent_ref[...]

    # Multi-pass f32 matmul only matters for f32 operands; bf16 is exact on MXU.
    prec = lax.Precision.HIGHEST if e.dtype == jnp.float32 else lax.Precision.DEFAULT

    # cross[k, j] = c_k . e_j  -- MXU with f32 accumulation, no tile upcast.
    cross = lax.dot_general(
        c, e, (((1,), (1,)), ((), ())),
        preferred_element_type=jnp.float32, precision=prec)          # (K, tile)

    # ||e_j||^2 as a lane vector: ones @ (e*e)^T on the otherwise-idle MXU.
    e32 = e.astype(jnp.float32)                         # f32 only for the square path
    e2 = e32 * e32
    e_norm = lax.dot_general(
        jnp.ones((8, D), jnp.float32), e2, (((1,), (1,)), ((), ())),
        preferred_element_type=jnp.float32,
        precision=lax.Precision.HIGHEST)[0:1, :]                      # (1, tile)

    c32 = c.astype(jnp.float32)
    c_norm = jnp.sum(c32 * c32, axis=1, keepdims=True)                # (K, 1)

    # ||e - c||^2 = ||e||^2 - 2 c.e + ||c||^2, clamped against f32 cancellation.
    norm_sq = jnp.maximum(e_norm + c_norm - 2.0 * cross, 0.0)         # (K, tile)
    numer = 1.0 / (1.0 + norm_sq)                                     # Student's-t
    denom = jnp.sum(numer, axis=0, keepdims=True)                     # (1, tile)
    qT_ref[...] = numer / denom                                       # exact division


def _round_up(x: int, m: int) -> int:
    return ((x + m - 1) // m) * m


def cluster_forward(emb, cluster_centers, *, tm_max=8192):
    """Student's-t soft assignment q with shape (N, K). emb may be f32 or bf16."""
    N, d = emb.shape
    assert d == D and cluster_centers.shape == (K, D)
    if cluster_centers.dtype != emb.dtype:
        cluster_centers = cluster_centers.astype(emb.dtype)   # tiny (2, 64) cast

    # --- tile / grid selection (no padding of emb; ragged last block is fine) ---
    n_steps = pl.cdiv(N, tm_max)
    if N > 128:
        # At least 2 steps and an even step count so v7x's two TensorCores are
        # balanced on the "parallel" axis (no effect on single-TC v5e/v6e).
        n_steps = max(2, n_steps)
        n_steps += n_steps % 2
    tile = _round_up(pl.cdiv(N, n_steps), 128)          # lane-dense q^T blocks
    grid = pl.cdiv(N, tile)

    qT = pl.pallas_call(
        cluster_kernel,
        out_shape=jax.ShapeDtypeStruct((K, N), jnp.float32),
        grid_spec=pltpu.PrefetchScalarGridSpec(
            num_scalar_prefetch=0,
            grid=(grid,),
            in_specs=[
                pl.BlockSpec((tile, D), lambda i: (i, 0)),   # emb row tile (ragged-safe)
                pl.BlockSpec((K, D), lambda i: (0, 0)),      # full centers, resident
            ],
            out_specs=pl.BlockSpec((K, tile), lambda i: (0, i)),  # lane-dense q^T
        ),
        compiler_params=pltpu.CompilerParams(
            dimension_semantics=("parallel",),
            vmem_limit_bytes=32 << 20,   # fits 8192-row tiles on v5e's 16 MiB default
        ),
    )(emb, cluster_centers)
    return qT.T                                          # (N, K), as in the module


def xavier_uniform_centers(key, fan_out=K, fan_in=D):
    # nn.init.xavier_uniform_ on a (2, 64) tensor: bound = sqrt(6 / (fan_in + fan_out))
    bound = (6.0 / (fan_in + fan_out)) ** 0.5
    return jax.random.uniform(
        key, (fan_out, fan_in), dtype=jnp.float32, minval=-bound, maxval=bound
    )


def cluster_reference(emb, centers):
    # Mirrors the torch forward exactly (in f32).
    e = emb.astype(jnp.float32)
    c = centers.astype(jnp.float32)
    norm_sq = jnp.sum((e[:, None, :] - c[None, :, :]) ** 2, axis=2)
    num = 1.0 / (1.0 + norm_sq)
    return num / jnp.sum(num, axis=1, keepdims=True)


if __name__ == "__main__":
    key = jax.random.PRNGKey(0)
    k_emb1, k_emb2, k_cent = jax.random.split(key, 3)

    centers = xavier_uniform_centers(k_cent)           # deterministic synthetic params

    # --- module-sized f32 batch (single ragged block, tile 128, 1 grid step) ---
    N1 = 16
    emb1 = jax.random.normal(k_emb1, (N1, D), dtype=jnp.float32)
    q1 = jax.block_until_ready(cluster_forward(emb1, centers))
    assert q1.shape == (N1, K)
    assert bool(jnp.all(jnp.abs(jnp.sum(q1, axis=1) - 1.0) < 1e-4))   # exact division now
    assert bool(jnp.all(jnp.abs(q1 - cluster_reference(emb1, centers)) < 2e-3))

    # --- larger bf16 batch: 2 grid steps, ragged last block, bf16->MXU path ---
    N2 = 300
    emb2 = jax.random.normal(k_emb2, (N2, D), dtype=jnp.float32).astype(jnp.bfloat16)
    cent_bf16 = centers.astype(jnp.bfloat16)
    q2 = jax.block_until_ready(cluster_forward(emb2, cent_bf16))
    assert q2.shape == (N2, K)
    assert bool(jnp.all(jnp.abs(jnp.sum(q2, axis=1) - 1.0) < 1e-4))
    assert bool(jnp.all(jnp.abs(q2 - cluster_reference(emb2, cent_bf16)) < 2e-3))

    # TODO(synk): the torch forward print()s q and calls exit(); no kernel
    # equivalent, we return q instead.
    print("KERNEL_OK")
</pallas_src>

<mosaic_0001>
module attributes {stable_mosaic.version = 11 : i64} {
  func.func @cluster_kernel(%arg0: i32, %arg1: memref<128x64xf32, #tpu.memory_space<vmem>>, %arg2: memref<2x64xf32, #tpu.memory_space<vmem>>, %arg3: memref<2x128xf32, #tpu.memory_space<vmem>>) attributes {dimension_semantics = [#tpu.dimension_semantics<parallel>], iteration_bounds = array<i64: 1>, scalar_prefetch = 0 : i64, scratch_operands = 0 : i64, tpu.core_type = #tpu.core_type<tc>, window_params = [{transform_indices = @transform_0, window_bounds = array<i64: 128, 64>}, {pipeline_mode = #tpu.pipeline_mode<synchronous>, transform_indices = @transform_1, window_bounds = array<i64: 2, 64>}, {transform_indices = @transform_2, window_bounds = array<i64: 2, 128>}]} {
    %c0 = arith.constant 0 : index
    %c0_0 = arith.constant 0 : index
    %0 = vector.load %arg1[%c0, %c0_0] : memref<128x64xf32, #tpu.memory_space<vmem>>, vector<128x64xf32>
    %c0_1 = arith.constant 0 : index
    %c0_2 = arith.constant 0 : index
    %1 = vector.load %arg2[%c0_1, %c0_2] : memref<2x64xf32, #tpu.memory_space<vmem>>, vector<2x64xf32>
    %cst = arith.constant dense<0.000000e+00> : vector<2x128xf32>
    %2 = tpu.matmul %1, %0, %cst {dimension_numbers = #tpu.dot_dimension_numbers<[1], [1], [0], [0], [0, 0, 1, 0], [], []>, precision = #tpu.contract_precision<fp32>} : vector<2x64xf32>, vector<128x64xf32>, vector<2x128xf32> -> vector<2x128xf32>
    %3 = arith.mulf %0, %0 : vector<128x64xf32>
    %cst_3 = arith.constant 1.000000e+00 : f32
    %4 = vector.broadcast %cst_3 : f32 to vector<8x64xf32>
    %cst_4 = arith.constant dense<0.000000e+00> : vector<8x128xf32>
    %5 = tpu.matmul %4, %3, %cst_4 {dimension_numbers = #tpu.dot_dimension_numbers<[1], [1], [0], [0], [0, 0, 1, 0], [], []>, precision = #tpu.contract_precision<fp32>} : vector<8x64xf32>, vector<128x64xf32>, vector<8x128xf32> -> vector<8x128xf32>
    %6 = vector.extract_strided_slice %5 {offsets = [0, 0], sizes = [1, 128], strides = [1, 1]} : vector<8x128xf32> to vector<1x128xf32>
    %7 = arith.mulf %1, %1 : vector<2x64xf32>
    %cst_5 = arith.constant dense<0.000000e+00> : vector<2xf32>
    %8 = vector.multi_reduction <add>, %7, %cst_5 [1] : vector<2x64xf32> to vector<2xf32>
    %9 = vector.shape_cast %8 : vector<2xf32> to vector<2x1xf32>
    %10 = vector.broadcast %6 : vector<1x128xf32> to vector<2x128xf32>
    %11 = vector.broadcast %9 : vector<2x1xf32> to vector<2x128xf32>
    %12 = arith.addf %10, %11 : vector<2x128xf32>
    %cst_6 = arith.constant 2.000000e+00 : f32
    %13 = vector.broadcast %cst_6 : f32 to vector<2x128xf32>
    %14 = arith.mulf %13, %2 : vector<2x128xf32>
    %15 = arith.subf %12, %14 : vector<2x128xf32>
    %cst_7 = arith.constant 0.000000e+00 : f32
    %16 = vector.broadcast %cst_7 : f32 to vector<2x128xf32>
    %17 = arith.maximumf %15, %16 : vector<2x128xf32>
    %cst_8 = arith.constant 1.000000e+00 : f32
    %18 = vector.broadcast %cst_8 : f32 to vector<2x128xf32>
    %19 = arith.addf %18, %17 : vector<2x128xf32>
    %cst_9 = arith.constant 1.000000e+00 : f32
    %20 = vector.broadcast %cst_9 : f32 to vector<2x128xf32>
    %21 = arith.divf %20, %19 : vector<2x128xf32>
    %cst_10 = arith.constant dense<0.000000e+00> : vector<128xf32>
    %22 = vector.multi_reduction <add>, %21, %cst_10 [0] : vector<2x128xf32> to vector<128xf32>
    %23 = vector.shape_cast %22 : vector<128xf32> to vector<1x128xf32>
    %24 = vector.broadcast %23 : vector<1x128xf32> to vector<2x128xf32>
    %25 = arith.divf %21, %24 : vector<2x128xf32>
    %c0_11 = arith.constant 0 : index
    %c0_12 = arith.constant 0 : index
    %26 = vector.load %arg3[%c0_11, %c0_12] : memref<2x128xf32, #tpu.memory_space<vmem>>, vector<2x128xf32>
    tpu.vector_store %arg3[%c0_11, %c0_12], %25 {strides = array<i32>} : memref<2x128xf32, #tpu.memory_space<vmem>>, vector<2x128xf32>,
    return
  }
  func.func @transform_0(%arg0: i32) -> (i32, i32) {
    %c0_i32 = arith.constant 0 : i32
    %c0_i32_0 = arith.constant 0 : i32
    return %arg0, %c0_i32 : i32, i32
  }
  func.func @transform_1(%arg0: i32) -> (i32, i32) {
    %c0_i32 = arith.constant 0 : i32
    %c0_i32_0 = arith.constant 0 : i32
    %c0_i32_1 = arith.constant 0 : i32
    return %c0_i32, %c0_i32_0 : i32, i32
  }
  func.func @transform_2(%arg0: i32) -> (i32, i32) {
    %c0_i32 = arith.constant 0 : i32
    %c0_i32_0 = arith.constant 0 : i32
    return %c0_i32, %arg0 : i32, i32
  }
}

</mosaic_0001>

<llo_original>
// kernel: tpu_custom_call.1
$region0: #{tpu_custom_call.1}
  #allocation0 [shape = 'u32[]', space=smem, size = 0x4, offset = 0x4, fixed_abs, tag = 'smem constant byte address 0x4 - core index']
  #allocation1 [shape = 'u32[144,128]{1,0:T(1,128)}', space=vmem, size = 0x12000, scoped, tag = 'internal scratch']
  %s0 = inlined_call_operand.hbm [shape: f32[16,64], index: 0, kind: input, shape index: {}]
  %s1 = inlined_call_operand.hbm [shape: f32[2,64], index: 1, kind: input, shape index: {}]
  %s2 = inlined_call_operand.hbm [shape: f32[2,16], index: 2, kind: output, shape index: {}]
  %s3 = sld [smem:[#allocation0]]
  $region26: #{tpu_custom_call.1} parent=0
    _
  %s5 = ssub.s32 1, %s3
  %s6 = scalar_select 0, %s5, %s3
  $region1: #{tpu_custom_call.1} parent=0
    #allocation2 [shape = 'u8[65536]{0}', space=vmem, size = 0x10000, scoped, tag = 'input window, operand 0, single buffered']
    #allocation3 [shape = 's32[1]{0}', space=sflag, size = 0x4, scoped, tag = 'scoped memory for tpu_custom_call.1']
    #allocation4 [shape = 's32[1]{0}', space=sflag, size = 0x4, scoped, tag = 'scoped memory for tpu_custom_call.1']
    #allocation5 [shape = 'u8[1024]{0}', space=vmem, size = 0x400, scoped, tag = 'input window, operand 1, single buffered']
    #allocation6 [shape = 's32[1]{0}', space=sflag, size = 0x4, scoped, tag = 'scoped memory for tpu_custom_call.1']
    #allocation7 [shape = 'u8[1024]{0}', space=vmem, size = 0x400, scoped, tag = 'output window, operand 0, single buffered']
    %7 = vsyncpa [#allocation3], 0
    %8 = vsyncpa [#allocation6], 0
    %9 = vsyncpa [#allocation4], 0
    // Predicated region
    $region2: #{tpu_custom_call.1} parent=1 // pred_check
      _
    $region3: #{tpu_custom_call.1} parent=1 // pred_check_branch
      %11 = sbr.rel (0) target = $region5
    $region4: #{tpu_custom_call.1} parent=1 // pred_region
      %s13 = ssub.s32 2048, 256
      %14 = vsyncadd [#allocation3], %s13
      %s15 = sshll.u32 [#allocation2], 4
      %s16 = int_to_ptr.vmem [resolvable:$true] %s15
      %21 = dma.hbm_to_vmem [thread:$0]  %s0, 256, %s16, [#allocation3], 128, 128, 8
    $region5: #{tpu_custom_call.1} parent=1 // pred_fallthru
      _
    // Predicated region
    $region6: #{tpu_custom_call.1} parent=1 // pred_check
      _
    $region7: #{tpu_custom_call.1} parent=1 // pred_check_branch
      %23 = sbr.rel (0) target = $region9
    $region8: #{tpu_custom_call.1} parent=1 // pred_region
      %s25 = ssub.s32 32, 32
      %26 = vsyncadd [#allocation6], %s25
      %s28 = sshll.u32 [#allocation5], 4
      %s29 = int_to_ptr.vmem [resolvable:$true] %s28
      %31 = dma.hbm_to_vmem [thread:$0]  %s1, 32, %s29, [#allocation6]
    $region9: #{tpu_custom_call.1} parent=1 // pred_fallthru
      _
    // Predicated region
    $region10: #{tpu_custom_call.1} parent=1 // pred_check
      _
    $region11: #{tpu_custom_call.1} parent=1 // pred_check_branch
      %33 = sbr.rel (0) target = $region13
    $region12: #{tpu_custom_call.1} parent=1 // pred_region
      %34 = dma.done [#allocation3], 2048
    $region13: #{tpu_custom_call.1} parent=1 // pred_fallthru
      _
    // Predicated region
    $region14: #{tpu_custom_call.1} parent=1 // pred_check
      _
    $region15: #{tpu_custom_call.1} parent=1 // pred_check_branch
      %36 = sbr.rel (0) target = $region17
    $region16: #{tpu_custom_call.1} parent=1 // pred_region
      %37 = dma.done [#allocation6], 32
    $region17: #{tpu_custom_call.1} parent=1 // pred_fallthru
      _
    %v38 = vld [vmem:[#allocation2] sm:$0xff]
    %v39 = vld [vmem:[#allocation2 + $0x8] sm:$0xff]
    %v40 = vld [vmem:[#allocation2 + $0x10] sm:$0xff]
    %v41 = vld [vmem:[#allocation2 + $0x18] sm:$0xff]
    %v42 = vld [vmem:[#allocation2 + $0x20] sm:$0xff]
    %v43 = vld [vmem:[#allocation2 + $0x28] sm:$0xff]
    %v44 = vld [vmem:[#allocation2 + $0x30] sm:$0xff]
    %v45 = vld [vmem:[#allocation2 + $0x38] sm:$0xff]
    %v46 = vld [vmem:[#allocation2 + $0x40] sm:$0xff]
    %v47 = vld [vmem:[#allocation2 + $0x48] sm:$0xff]
    %v48 = vld [vmem:[#allocation2 + $0x50] sm:$0xff]
    %v49 = vld [vmem:[#allocation2 + $0x58] sm:$0xff]
    %v50 = vld [vmem:[#allocation2 + $0x60] sm:$0xff]
    %v51 = vld [vmem:[#allocation2 + $0x68] sm:$0xff]
    %v52 = vld [vmem:[#allocation2 + $0x70] sm:$0xff]
    %v53 = vld [vmem:[#allocation2 + $0x78] sm:$0xff]
    %v54 = vld [vmem:[#allocation5] sm:$0x3]
    %vm55 = vcmask 523264
    %v57 = vsel %vm55, %v54, 0
    %v60 = vsel %vm55, %v38, 0
    %v63 = vsel %vm55, %v39, 0
    %v66 = vsel %vm55, %v40, 0
    %v69 = vsel %vm55, %v41, 0
    %v72 = vsel %vm55, %v42, 0
    %v75 = vsel %vm55, %v43, 0
    %v78 = vsel %vm55, %v44, 0
    %v81 = vsel %vm55, %v45, 0
    %v84 = vsel %vm55, %v46, 0
    %v87 = vsel %vm55, %v47, 0
    %v90 = vsel %vm55, %v48, 0
    %v93 = vsel %vm55, %v49, 0
    %v96 = vsel %vm55, %v50, 0
    %v99 = vsel %vm55, %v51, 0
    %v102 = vsel %vm55, %v52, 0
    %v105 = vsel %vm55, %v53, 0
    %107 = vmatprep.subr.mxu0 0.0
    %v108 = vand.u32 %v105, 4294901760
    %109 = vmatpush1.xpose.msra.mxu0 %v108
    %110 = vmatprep.subr.mxu0 0.0
    %v111 = vand.u32 %v102, 4294901760
    %112 = vmatpush1.xpose.msra.mxu0 %v111
    %113 = vmatprep.subr.mxu0 0.0
    %v114 = vand.u32 %v99, 4294901760
    %115 = vmatpush1.xpose.msra.mxu0 %v114
    %116 = vmatprep.subr.mxu0 0.0
    %v117 = vand.u32 %v96, 4294901760
    %118 = vmatpush1.xpose.msra.mxu0 %v117
    %119 = vmatprep.subr.mxu0 0.0
    %v120 = vand.u32 %v93, 4294901760
    %121 = vmatpush1.xpose.msra.mxu0 %v120
    %122 = vmatprep.subr.mxu0 0.0
    %v123 = vand.u32 %v90, 4294901760
    %124 = vmatpush1.xpose.msra.mxu0 %v123
    %125 = vmatprep.subr.mxu0 0.0
    %v126 = vand.u32 %v87, 4294901760
    %127 = vmatpush1.xpose.msra.mxu0 %v126
    %128 = vmatprep.subr.mxu0 0.0
    %v129 = vand.u32 %v84, 4294901760
    %130 = vmatpush1.xpose.msra.mxu0 %v129
    %131 = vmatprep.subr.mxu0 0.0
    %v132 = vand.u32 %v81, 4294901760
    %133 = vmatpush1.xpose.msra.mxu0 %v132
    %134 = vmatprep.subr.mxu0 0.0
    %v135 = vand.u32 %v78, 4294901760
    %136 = vmatpush1.xpose.msra.mxu0 %v135
    %137 = vmatprep.subr.mxu0 0.0
    %v138 = vand.u32 %v75, 4294901760
    %139 = vmatpush1.xpose.msra.mxu0 %v138
    %140 = vmatprep.subr.mxu0 0.0
    %v141 = vand.u32 %v72, 4294901760
    %142 = vmatpush1.xpose.msra.mxu0 %v141
    %143 = vmatprep.subr.mxu0 0.0
    %v144 = vand.u32 %v69, 4294901760
    %145 = vmatpush1.xpose.msra.mxu0 %v144
    %146 = vmatprep.subr.mxu0 0.0
    %v147 = vand.u32 %v66, 4294901760
    %148 = vmatpush1.xpose.msra.mxu0 %v147
    %149 = vmatprep.subr.mxu0 0.0
    %v150 = vand.u32 %v63, 4294901760
    %151 = vmatpush1.xpose.msra.mxu0 %v150
    %152 = vmatprep.subr.mxu0 0.0
    %v153 = vand.u32 %v60, 4294901760
    %154 = vmatpush1.xpose.msra.mxu0 %v153
    %155 = vmatprep.subr.mxu0 0.0
    %156 = vmatpush2.xpose.msra.mxu0 0.0
    %157 = vmatprep.subr.mxu0 0.0
    %158 = vmatpush2.xpose.msra.mxu0 0.0
    %159 = vmatprep.subr.mxu0 0.0
    %160 = vmatpush2.xpose.msra.mxu0 0.0
    %161 = vmatprep.subr.mxu0 0.0
    %162 = vmatpush2.xpose.msra.mxu0 0.0
    %163 = vmatprep.subr.mxu0 0.0
    %164 = vmatpush2.xpose.msra.mxu0 0.0
    %165 = vmatprep.subr.mxu0 0.0
    %166 = vmatpush2.xpose.msra.mxu0 0.0
    %167 = vmatprep.subr.mxu0 0.0
    %168 = vmatpush2.xpose.msra.mxu0 0.0
    %169 = vmatprep.subr.mxu0 0.0
    %170 = vmatpush2.xpose.msra.mxu0 0.0
    %171 = vmatprep.subr.mxu0 0.0
    %172 = vmatpush2.xpose.msra.mxu0 0.0
    %173 = vmatprep.subr.mxu0 0.0
    %174 = vmatpush2.xpose.msra.mxu0 0.0
    %175 = vmatprep.subr.mxu0 0.0
    %176 = vmatpush2.xpose.msra.mxu0 0.0
    %177 = vmatprep.subr.mxu0 0.0
    %178 = vmatpush2.xpose.msra.mxu0 0.0
    %179 = vmatprep.subr.mxu0 0.0
    %180 = vmatpush2.xpose.msra.mxu0 0.0
    %181 = vmatprep.subr.mxu0 0.0
    %182 = vmatpush2.xpose.msra.mxu0 0.0
    %183 = vmatprep.subr.mxu0 0.0
    %184 = vmatpush2.xpose.msra.mxu0 0.0
    %185 = vmatprep.subr.mxu0 0.0
    %186 = vmatpush2.xpose.msra.mxu0 0.0
    %187 = vmatprep.mubr.f32.mxu0 0.0
    %v188 = vand.u32 %v57, 4294901760
    %v189 = vsub.f32 %v57, %v188
    %v190 = vand.u32 %v189, 4294901760
    %v191 = vsub.f32 %v189, %v190
    %v192 = vand.u32 %v191, 4294901760
    %193 = vmatmul.mubr.f32.gmra.mxu0 %v192
    %v194 = vpop.f32.mrf.mxu0
    %v195 = vadd.f32 0.0, %v194
    %v196 = vpop.f32.mrf.mxu0
    %197 = vdwg.mxu0
    %198 = vmatprep.subr.mxu0 0.0
    %v199 = vand.u32 %v105, 4294901760
    %v200 = vsub.f32 %v105, %v199
    %v201 = vand.u32 %v200, 4294901760
    %v202 = vsub.f32 %v200, %v201
    %v203 = vand.u32 %v202, 4294901760
    %204 = vmatpush1.xpose.msra.mxu0 %v203
    %205 = vmatprep.subr.mxu0 0.0
    %v206 = vand.u32 %v102, 4294901760
    %v207 = vsub.f32 %v102, %v206
    %v208 = vand.u32 %v207, 4294901760
    %v209 = vsub.f32 %v207, %v208
    %v210 = vand.u32 %v209, 4294901760
    %211 = vmatpush1.xpose.msra.mxu0 %v210
    %212 = vmatprep.subr.mxu0 0.0
    %v213 = vand.u32 %v99, 4294901760
    %v214 = vsub.f32 %v99, %v213
    %v215 = vand.u32 %v214, 4294901760
    %v216 = vsub.f32 %v214, %v215
    %v217 = vand.u32 %v216, 4294901760
    %218 = vmatpush1.xpose.msra.mxu0 %v217
    %219 = vmatprep.subr.mxu0 0.0
    %v220 = vand.u32 %v96, 4294901760
    %v221 = vsub.f32 %v96, %v220
    %v222 = vand.u32 %v221, 4294901760
    %v223 = vsub.f32 %v221, %v222
    %v224 = vand.u32 %v223, 4294901760
    %225 = vmatpush1.xpose.msra.mxu0 %v224
    %226 = vmatprep.subr.mxu0 0.0
    %v227 = vand.u32 %v93, 4294901760
    %v228 = vsub.f32 %v93, %v227
    %v229 = vand.u32 %v228, 4294901760
    %v230 = vsub.f32 %v228, %v229
    %v231 = vand.u32 %v230, 4294901760
    %232 = vmatpush1.xpose.msra.mxu0 %v231
    %233 = vmatprep.subr.mxu0 0.0
    %v234 = vand.u32 %v90, 4294901760
    %v235 = vsub.f32 %v90, %v234
    %v236 = vand.u32 %v235, 4294901760
    %v237 = vsub.f32 %v235, %v236
    %v238 = vand.u32 %v237, 4294901760
    %239 = vmatpush1.xpose.msra.mxu0 %v238
    %240 = vmatprep.subr.mxu0 0.0
    %v241 = vand.u32 %v87, 4294901760
    %v242 = vsub.f32 %v87, %v241
    %v243 = vand.u32 %v242, 4294901760
    %v244 = vsub.f32 %v242, %v243
    %v245 = vand.u32 %v244, 4294901760
    %246 = vmatpush1.xpose.msra.mxu0 %v245
    %247 = vmatprep.subr.mxu0 0.0
    %v248 = vand.u32 %v84, 4294901760
    %v249 = vsub.f32 %v84, %v248
    %v250 = vand.u32 %v249, 4294901760
    %v251 = vsub.f32 %v249, %v250
    %v252 = vand.u32 %v251, 4294901760
    %253 = vmatpush1.xpose.msra.mxu0 %v252
    %254 = vmatprep.subr.mxu0 0.0
    %v255 = vand.u32 %v81, 4294901760
    %v256 = vsub.f32 %v81, %v255
    %v257 = vand.u32 %v256, 4294901760
    %v258 = vsub.f32 %v256, %v257
    %v259 = vand.u32 %v258, 4294901760
    %260 = vmatpush1.xpose.msra.mxu0 %v259
    %261 = vmatprep.subr.mxu0 0.0
    %v262 = vand.u32 %v78, 4294901760
    %v263 = vsub.f32 %v78, %v262
    %v264 = vand.u32 %v263, 4294901760
    %v265 = vsub.f32 %v263, %v264
    %v266 = vand.u32 %v265, 4294901760
    %267 = vmatpush1.xpose.msra.mxu0 %v266
    %268 = vmatprep.subr.mxu0 0.0
    %v269 = vand.u32 %v75, 4294901760
    %v270 = vsub.f32 %v75, %v269
    %v271 = vand.u32 %v270, 4294901760
    %v272 = vsub.f32 %v270, %v271
    %v273 = vand.u32 %v272, 4294901760
    %274 = vmatpush1.xpose.msra.mxu0 %v273
    %275 = vmatprep.subr.mxu0 0.0
    %v276 = vand.u32 %v72, 4294901760
    %v277 = vsub.f32 %v72, %v276
    %v278 = vand.u32 %v277, 4294901760
    %v279 = vsub.f32 %v277, %v278
    %v280 = vand.u32 %v279, 4294901760
    %281 = vmatpush1.xpose.msra.mxu0 %v280
    %282 = vmatprep.subr.mxu0 0.0
    %v283 = vand.u32 %v69, 4294901760
    %v284 = vsub.f32 %v69, %v283
    %v285 = vand.u32 %v284, 4294901760
    %v286 = vsub.f32 %v284, %v285
    %v287 = vand.u32 %v286, 4294901760
    %288 = vmatpush1.xpose.msra.mxu0 %v287
    %289 = vmatprep.subr.mxu0 0.0
    %v290 = vand.u32 %v66, 4294901760
    %v291 = vsub.f32 %v66, %v290
    %v292 = vand.u32 %v291, 4294901760
    %v293 = vsub.f32 %v291, %v292
    %v294 = vand.u32 %v293, 4294901760
    %295 = vmatpush1.xpose.msra.mxu0 %v294
    %296 = vmatprep.subr.mxu0 0.0
    %v297 = vand.u32 %v63, 4294901760
    %v298 = vsub.f32 %v63, %v297
    %v299 = vand.u32 %v298, 4294901760
    %v300 = vsub.f32 %v298, %v299
    %v301 = vand.u32 %v300, 4294901760
    %302 = vmatpush1.xpose.msra.mxu0 %v301
    %303 = vmatprep.subr.mxu0 0.0
    %v304 = vand.u32 %v60, 4294901760
    %v305 = vsub.f32 %v60, %v304
    %v306 = vand.u32 %v305, 4294901760
    %v307 = vsub.f32 %v305, %v306
    %v308 = vand.u32 %v307, 4294901760
    %309 = vmatpush1.xpose.msra.mxu0 %v308
    %310 = vmatprep.subr.mxu0 0.0
    %311 = vmatpush2.xpose.msra.mxu0 0.0
    %312 = vmatprep.subr.mxu0 0.0
    %313 = vmatpush2.xpose.msra.mxu0 0.0
    %314 = vmatprep.subr.mxu0 0.0
    %315 = vmatpush2.xpose.msra.mxu0 0.0
    %316 = vmatprep.subr.mxu0 0.0
    %317 = vmatpush2.xpose.msra.mxu0 0.0
    %318 = vmatprep.subr.mxu0 0.0
    %319 = vmatpush2.xpose.msra.mxu0 0.0
    %320 = vmatprep.subr.mxu0 0.0
    %321 = vmatpush2.xpose.msra.mxu0 0.0
    %322 = vmatprep.subr.mxu0 0.0
    %323 = vmatpush2.xpose.msra.mxu0 0.0
    %324 = vmatprep.subr.mxu0 0.0
    %325 = vmatpush2.xpose.msra.mxu0 0.0
    %326 = vmatprep.subr.mxu0 0.0
    %327 = vmatpush2.xpose.msra.mxu0 0.0
    %328 = vmatprep.subr.mxu0 0.0
    %329 = vmatpush2.xpose.msra.mxu0 0.0
    %330 = vmatprep.subr.mxu0 0.0
    %331 = vmatpush2.xpose.msra.mxu0 0.0
    %332 = vmatprep.subr.mxu0 0.0
    %333 = vmatpush2.xpose.msra.mxu0 0.0
    %334 = vmatprep.subr.mxu0 0.0
    %335 = vmatpush2.xpose.msra.mxu0 0.0
    %336 = vmatprep.subr.mxu0 0.0
    %337 = vmatpush2.xpose.msra.mxu0 0.0
    %338 = vmatprep.subr.mxu0 0.0
    %339 = vmatpush2.xpose.msra.mxu0 0.0
    %340 = vmatprep.subr.mxu0 0.0
    %341 = vmatpush2.xpose.msra.mxu0 0.0
    %342 = vmatprep.mubr.f32.mxu0 0.0
    %v343 = vand.u32 %v57, 4294901760
    %344 = vmatmul.mubr.f32.gmra.mxu0 %v343
    %v345 = vpop.f32.mrf.mxu0
    %v346 = vadd.f32 %v195, %v345
    %v347 = vpop.f32.mrf.mxu0
    %348 = vdwg.mxu0
    %349 = vmatprep.subr.mxu0 0.0
    %v350 = vand.u32 %v105, 4294901760
    %v351 = vsub.f32 %v105, %v350
    %352 = vmatpush1.xpose.msra.mxu0 %v351
    %353 = vmatprep.subr.mxu0 0.0
    %v354 = vand.u32 %v102, 4294901760
    %v355 = vsub.f32 %v102, %v354
    %356 = vmatpush1.xpose.msra.mxu0 %v355
    %357 = vmatprep.subr.mxu0 0.0
    %v358 = vand.u32 %v99, 4294901760
    %v359 = vsub.f32 %v99, %v358
    %360 = vmatpush1.xpose.msra.mxu0 %v359
    %361 = vmatprep.subr.mxu0 0.0
    %v362 = vand.u32 %v96, 4294901760
    %v363 = vsub.f32 %v96, %v362
    %364 = vmatpush1.xpose.msra.mxu0 %v363
    %365 = vmatprep.subr.mxu0 0.0
    %v366 = vand.u32 %v93, 4294901760
    %v367 = vsub.f32 %v93, %v366
    %368 = vmatpush1.xpose.msra.mxu0 %v367
    %369 = vmatprep.subr.mxu0 0.0
    %v370 = vand.u32 %v90, 4294901760
    %v371 = vsub.f32 %v90, %v370
    %372 = vmatpush1.xpose.msra.mxu0 %v371
    %373 = vmatprep.subr.mxu0 0.0
    %v374 = vand.u32 %v87, 4294901760
    %v375 = vsub.f32 %v87, %v374
    %376 = vmatpush1.xpose.msra.mxu0 %v375
    %377 = vmatprep.subr.mxu0 0.0
    %v378 = vand.u32 %v84, 4294901760
    %v379 = vsub.f32 %v84, %v378
    %380 = vmatpush1.xpose.msra.mxu0 %v379
    %381 = vmatprep.subr.mxu0 0.0
    %v382 = vand.u32 %v81, 4294901760
    %v383 = vsub.f32 %v81, %v382
    %384 = vmatpush1.xpose.msra.mxu0 %v383
    %385 = vmatprep.subr.mxu0 0.0
    %v386 = vand.u32 %v78, 4294901760
    %v387 = vsub.f32 %v78, %v386
    %388 = vmatpush1.xpose.msra.mxu0 %v387
    %389 = vmatprep.subr.mxu0 0.0
    %v390 = vand.u32 %v75, 4294901760
    %v391 = vsub.f32 %v75, %v390
    %392 = vmatpush1.xpose.msra.mxu0 %v391
    %393 = vmatprep.subr.mxu0 0.0
    %v394 = vand.u32 %v72, 4294901760
    %v395 = vsub.f32 %v72, %v394
    %396 = vmatpush1.xpose.msra.mxu0 %v395
    %397 = vmatprep.subr.mxu0 0.0
    %v398 = vand.u32 %v69, 4294901760
    %v399 = vsub.f32 %v69, %v398
    %400 = vmatpush1.xpose.msra.mxu0 %v399
    %401 = vmatprep.subr.mxu0 0.0
    %v402 = vand.u32 %v66, 4294901760
    %v403 = vsub.f32 %v66, %v402
    %404 = vmatpush1.xpose.msra.mxu0 %v403
    %405 = vmatprep.subr.mxu0 0.0
    %v406 = vand.u32 %v63, 4294901760
    %v407 = vsub.f32 %v63, %v406
    %408 = vmatpush1.xpose.msra.mxu0 %v407
    %409 = vmatprep.subr.mxu0 0.0
    %v410 = vand.u32 %v60, 4294901760
    %v411 = vsub.f32 %v60, %v410
    %412 = vmatpush1.xpose.msra.mxu0 %v411
    %413 = vmatprep.subr.mxu0 0.0
    %414 = vmatpush2.xpose.msra.mxu0 0.0
    %415 = vmatprep.subr.mxu0 0.0
    %416 = vmatpush2.xpose.msra.mxu0 0.0
    %417 = vmatprep.subr.mxu0 0.0
    %418 = vmatpush2.xpose.msra.mxu0 0.0
    %419 = vmatprep.subr.mxu0 0.0
    %420 = vmatpush2.xpose.msra.mxu0 0.0
    %421 = vmatprep.subr.mxu0 0.0
    %422 = vmatpush2.xpose.msra.mxu0 0.0
    %423 = vmatprep.subr.mxu0 0.0
    %424 = vmatpush2.xpose.msra.mxu0 0.0
    %425 = vmatprep.subr.mxu0 0.0
    %426 = vmatpush2.xpose.msra.mxu0 0.0
    %427 = vmatprep.subr.mxu0 0.0
    %428 = vmatpush2.xpose.msra.mxu0 0.0
    %429 = vmatprep.subr.mxu0 0.0
    %430 = vmatpush2.xpose.msra.mxu0 0.0
    %431 = vmatprep.subr.mxu0 0.0
    %432 = vmatpush2.xpose.msra.mxu0 0.0
    %433 = vmatprep.subr.mxu0 0.0
    %434 = vmatpush2.xpose.msra.mxu0 0.0
    %435 = vmatprep.subr.mxu0 0.0
    %436 = vmatpush2.xpose.msra.mxu0 0.0
    %437 = vmatprep.subr.mxu0 0.0
    %438 = vmatpush2.xpose.msra.mxu0 0.0
    %439 = vmatprep.subr.mxu0 0.0
    %440 = vmatpush2.xpose.msra.mxu0 0.0
    %441 = vmatprep.subr.mxu0 0.0
    %442 = vmatpush2.xpose.msra.mxu0 0.0
    %443 = vmatprep.subr.mxu0 0.0
    %444 = vmatpush2.xpose.msra.mxu0 0.0
    %445 = vmatprep.mubr.f32.mxu0 0.0
    %v446 = vand.u32 %v57, 4294901760
    %v447 = vsub.f32 %v57, %v446
    %448 = vmatmul.mubr.f32.gmra.mxu0 %v447
    %v449 = vpop.f32.mrf.mxu0
    %v450 = vadd.f32 %v346, %v449
    %v451 = vpop.f32.mrf.mxu0
    %452 = vdwg.mxu0
    %453 = vmatprep.subr.mxu0 0.0
    %v454 = vand.u32 %v105, 4294901760
    %455 = vmatpush1.xpose.msra.mxu0 %v454
    %456 = vmatprep.subr.mxu0 0.0
    %v457 = vand.u32 %v102, 4294901760
    %458 = vmatpush1.xpose.msra.mxu0 %v457
    %459 = vmatprep.subr.mxu0 0.0
    %v460 = vand.u32 %v99, 4294901760
    %461 = vmatpush1.xpose.msra.mxu0 %v460
    %462 = vmatprep.subr.mxu0 0.0
    %v463 = vand.u32 %v96, 4294901760
    %464 = vmatpush1.xpose.msra.mxu0 %v463
    %465 = vmatprep.subr.mxu0 0.0
    %v466 = vand.u32 %v93, 4294901760
    %467 = vmatpush1.xpose.msra.mxu0 %v466
    %468 = vmatprep.subr.mxu0 0.0
    %v469 = vand.u32 %v90, 4294901760
    %470 = vmatpush1.xpose.msra.mxu0 %v469
    %471 = vmatprep.subr.mxu0 0.0
    %v472 = vand.u32 %v87, 4294901760
    %473 = vmatpush1.xpose.msra.mxu0 %v472
    %474 = vmatprep.subr.mxu0 0.0
    %v475 = vand.u32 %v84, 4294901760
    %476 = vmatpush1.xpose.msra.mxu0 %v475
    %477 = vmatprep.subr.mxu0 0.0
    %v478 = vand.u32 %v81, 4294901760
    %479 = vmatpush1.xpose.msra.mxu0 %v478
    %480 = vmatprep.subr.mxu0 0.0
    %v481 = vand.u32 %v78, 4294901760
    %482 = vmatpush1.xpose.msra.mxu0 %v481
    %483 = vmatprep.subr.mxu0 0.0
    %v484 = vand.u32 %v75, 4294901760
    %485 = vmatpush1.xpose.msra.mxu0 %v484
    %486 = vmatprep.subr.mxu0 0.0
    %v487 = vand.u32 %v72, 4294901760
    %488 = vmatpush1.xpose.msra.mxu0 %v487
    %489 = vmatprep.subr.mxu0 0.0
    %v490 = vand.u32 %v69, 4294901760
    %491 = vmatpush1.xpose.msra.mxu0 %v490
    %492 = vmatprep.subr.mxu0 0.0
    %v493 = vand.u32 %v66, 4294901760
    %494 = vmatpush1.xpose.msra.mxu0 %v493
    %495 = vmatprep.subr.mxu0 0.0
    %v496 = vand.u32 %v63, 4294901760
    %497 = vmatpush1.xpose.msra.mxu0 %v496
    %498 = vmatprep.subr.mxu0 0.0
    %v499 = vand.u32 %v60, 4294901760
    %500 = vmatpush1.xpose.msra.mxu0 %v499
    %501 = vmatprep.subr.mxu0 0.0
    %502 = vmatpush2.xpose.msra.mxu0 0.0
    %503 = vmatprep.subr.mxu0 0.0
    %504 = vmatpush2.xpose.msra.mxu0 0.0
    %505 = vmatprep.subr.mxu0 0.0
    %506 = vmatpush2.xpose.msra.mxu0 0.0
    %507 = vmatprep.subr.mxu0 0.0
    %508 = vmatpush2.xpose.msra.mxu0 0.0
    %509 = vmatprep.subr.mxu0 0.0
    %510 = vmatpush2.xpose.msra.mxu0 0.0
    %511 = vmatprep.subr.mxu0 0.0
    %512 = vmatpush2.xpose.msra.mxu0 0.0
    %513 = vmatprep.subr.mxu0 0.0
    %514 = vmatpush2.xpose.msra.mxu0 0.0
    %515 = vmatprep.subr.mxu0 0.0
    %516 = vmatpush2.xpose.msra.mxu0 0.0
    %517 = vmatprep.subr.mxu0 0.0
    %518 = vmatpush2.xpose.msra.mxu0 0.0
    %519 = vmatprep.subr.mxu0 0.0
    %520 = vmatpush2.xpose.msra.mxu0 0.0
    %521 = vmatprep.subr.mxu0 0.0
    %522 = vmatpush2.xpose.msra.mxu0 0.0
    %523 = vmatprep.subr.mxu0 0.0
    %524 = vmatpush2.xpose.msra.mxu0 0.0
    %525 = vmatprep.subr.mxu0 0.0
    %526 = vmatpush2.xpose.msra.mxu0 0.0
    %527 = vmatprep.subr.mxu0 0.0
    %528 = vmatpush2.xpose.msra.mxu0 0.0
    %529 = vmatprep.subr.mxu0 0.0
    %530 = vmatpush2.xpose.msra.mxu0 0.0
    %531 = vmatprep.subr.mxu0 0.0
    %532 = vmatpush2.xpose.msra.mxu0 0.0
    %533 = vmatprep.mubr.f32.mxu0 0.0
    %v534 = vand.u32 %v57, 4294901760
    %v535 = vsub.f32 %v57, %v534
    %v536 = vand.u32 %v535, 4294901760
    %537 = vmatmul.mubr.f32.gmra.mxu0 %v536
    %v538 = vpop.f32.mrf.mxu0
    %v539 = vadd.f32 %v450, %v538
    %v540 = vpop.f32.mrf.mxu0
    %541 = vdwg.mxu0
    %542 = vmatprep.subr.mxu0 0.0
    %v543 = vand.u32 %v105, 4294901760
    %v544 = vsub.f32 %v105, %v543
    %v545 = vand.u32 %v544, 4294901760
    %546 = vmatpush1.xpose.msra.mxu0 %v545
    %547 = vmatprep.subr.mxu0 0.0
    %v548 = vand.u32 %v102, 4294901760
    %v549 = vsub.f32 %v102, %v548
    %v550 = vand.u32 %v549, 4294901760
    %551 = vmatpush1.xpose.msra.mxu0 %v550
    %552 = vmatprep.subr.mxu0 0.0
    %v553 = vand.u32 %v99, 4294901760
    %v554 = vsub.f32 %v99, %v553
    %v555 = vand.u32 %v554, 4294901760
    %556 = vmatpush1.xpose.msra.mxu0 %v555
    %557 = vmatprep.subr.mxu0 0.0
    %v558 = vand.u32 %v96, 4294901760
    %v559 = vsub.f32 %v96, %v558
    %v560 = vand.u32 %v559, 4294901760
    %561 = vmatpush1.xpose.msra.mxu0 %v560
    %562 = vmatprep.subr.mxu0 0.0
    %v563 = vand.u32 %v93, 4294901760
    %v564 = vsub.f32 %v93, %v563
    %v565 = vand.u32 %v564, 4294901760
    %566 = vmatpush1.xpose.msra.mxu0 %v565
    %567 = vmatprep.subr.mxu0 0.0
    %v568 = vand.u32 %v90, 4294901760
    %v569 = vsub.f32 %v90, %v568
    %v570 = vand.u32 %v569, 4294901760
    %571 = vmatpush1.xpose.msra.mxu0 %v570
    %572 = vmatprep.subr.mxu0 0.0
    %v573 = vand.u32 %v87, 4294901760
    %v574 = vsub.f32 %v87, %v573
    %v575 = vand.u32 %v574, 4294901760
    %576 = vmatpush1.xpose.msra.mxu0 %v575
    %577 = vmatprep.subr.mxu0 0.0
    %v578 = vand.u32 %v84, 4294901760
    %v579 = vsub.f32 %v84, %v578
    %v580 = vand.u32 %v579, 4294901760
    %581 = vmatpush1.xpose.msra.mxu0 %v580
    %582 = vmatprep.subr.mxu0 0.0
    %v583 = vand.u32 %v81, 4294901760
    %v584 = vsub.f32 %v81, %v583
    %v585 = vand.u32 %v584, 4294901760
    %586 = vmatpush1.xpose.msra.mxu0 %v585
    %587 = vmatprep.subr.mxu0 0.0
    %v588 = vand.u32 %v78, 4294901760
    %v589 = vsub.f32 %v78, %v588
    %v590 = vand.u32 %v589, 4294901760
    %591 = vmatpush1.xpose.msra.mxu0 %v590
    %592 = vmatprep.subr.mxu0 0.0
    %v593 = vand.u32 %v75, 4294901760
    %v594 = vsub.f32 %v75, %v593
    %v595 = vand.u32 %v594, 4294901760
    %596 = vmatpush1.xpose.msra.mxu0 %v595
    %597 = vmatprep.subr.mxu0 0.0
    %v598 = vand.u32 %v72, 4294901760
    %v599 = vsub.f32 %v72, %v598
    %v600 = vand.u32 %v599, 4294901760
    %601 = vmatpush1.xpose.msra.mxu0 %v600
    %602 = vmatprep.subr.mxu0 0.0
    %v603 = vand.u32 %v69, 4294901760
    %v604 = vsub.f32 %v69, %v603
    %v605 = vand.u32 %v604, 4294901760
    %606 = vmatpush1.xpose.msra.mxu0 %v605
    %607 = vmatprep.subr.mxu0 0.0
    %v608 = vand.u32 %v66, 4294901760
    %v609 = vsub.f32 %v66, %v608
    %v610 = vand.u32 %v609, 4294901760
    %611 = vmatpush1.xpose.msra.mxu0 %v610
    %612 = vmatprep.subr.mxu0 0.0
    %v613 = vand.u32 %v63, 4294901760
    %v614 = vsub.f32 %v63, %v613
    %v615 = vand.u32 %v614, 4294901760
    %616 = vmatpush1.xpose.msra.mxu0 %v615
    %617 = vmatprep.subr.mxu0 0.0
    %v618 = vand.u32 %v60, 4294901760
    %v619 = vsub.f32 %v60, %v618
    %v620 = vand.u32 %v619, 4294901760
    %621 = vmatpush1.xpose.msra.mxu0 %v620
    %622 = vmatprep.subr.mxu0 0.0
    %623 = vmatpush2.xpose.msra.mxu0 0.0
    %624 = vmatprep.subr.mxu0 0.0
    %625 = vmatpush2.xpose.msra.mxu0 0.0
    %626 = vmatprep.subr.mxu0 0.0
    %627 = vmatpush2.xpose.msra.mxu0 0.0
    %628 = vmatprep.subr.mxu0 0.0
    %629 = vmatpush2.xpose.msra.mxu0 0.0
    %630 = vmatprep.subr.mxu0 0.0
    %631 = vmatpush2.xpose.msra.mxu0 0.0
    %632 = vmatprep.subr.mxu0 0.0
    %633 = vmatpush2.xpose.msra.mxu0 0.0
    %634 = vmatprep.subr.mxu0 0.0
    %635 = vmatpush2.xpose.msra.mxu0 0.0
    %636 = vmatprep.subr.mxu0 0.0
    %637 = vmatpush2.xpose.msra.mxu0 0.0
    %638 = vmatprep.subr.mxu0 0.0
    %639 = vmatpush2.xpose.msra.mxu0 0.0
    %640 = vmatprep.subr.mxu0 0.0
    %641 = vmatpush2.xpose.msra.mxu0 0.0
    %642 = vmatprep.subr.mxu0 0.0
    %643 = vmatpush2.xpose.msra.mxu0 0.0
    %644 = vmatprep.subr.mxu0 0.0
    %645 = vmatpush2.xpose.msra.mxu0 0.0
    %646 = vmatprep.subr.mxu0 0.0
    %647 = vmatpush2.xpose.msra.mxu0 0.0
    %648 = vmatprep.subr.mxu0 0.0
    %649 = vmatpush2.xpose.msra.mxu0 0.0
    %650 = vmatprep.subr.mxu0 0.0
    %651 = vmatpush2.xpose.msra.mxu0 0.0
    %652 = vmatprep.subr.mxu0 0.0
    %653 = vmatpush2.xpose.msra.mxu0 0.0
    %654 = vmatprep.mubr.f32.mxu0 0.0
    %v655 = vand.u32 %v57, 4294901760
    %656 = vmatmul.mubr.f32.gmra.mxu0 %v655
    %v657 = vpop.f32.mrf.mxu0
    %v658 = vadd.f32 %v539, %v657
    %v659 = vpop.f32.mrf.mxu0
    %660 = vdwg.mxu0
    %661 = vmatprep.subr.mxu0 0.0
    %v662 = vand.u32 %v105, 4294901760
    %663 = vmatpush1.xpose.msra.mxu0 %v662
    %664 = vmatprep.subr.mxu0 0.0
    %v665 = vand.u32 %v102, 4294901760
    %666 = vmatpush1.xpose.msra.mxu0 %v665
    %667 = vmatprep.subr.mxu0 0.0
    %v668 = vand.u32 %v99, 4294901760
    %669 = vmatpush1.xpose.msra.mxu0 %v668
    %670 = vmatprep.subr.mxu0 0.0
    %v671 = vand.u32 %v96, 4294901760
    %672 = vmatpush1.xpose.msra.mxu0 %v671
    %673 = vmatprep.subr.mxu0 0.0
    %v674 = vand.u32 %v93, 4294901760
    %675 = vmatpush1.xpose.msra.mxu0 %v674
    %676 = vmatprep.subr.mxu0 0.0
    %v677 = vand.u32 %v90, 4294901760
    %678 = vmatpush1.xpose.msra.mxu0 %v677
    %679 = vmatprep.subr.mxu0 0.0
    %v680 = vand.u32 %v87, 4294901760
    %681 = vmatpush1.xpose.msra.mxu0 %v680
    %682 = vmatprep.subr.mxu0 0.0
    %v683 = vand.u32 %v84, 4294901760
    %684 = vmatpush1.xpose.msra.mxu0 %v683
    %685 = vmatprep.subr.mxu0 0.0
    %v686 = vand.u32 %v81, 4294901760
    %687 = vmatpush1.xpose.msra.mxu0 %v686
    %688 = vmatprep.subr.mxu0 0.0
    %v689 = vand.u32 %v78, 4294901760
    %690 = vmatpush1.xpose.msra.mxu0 %v689
    %691 = vmatprep.subr.mxu0 0.0
    %v692 = vand.u32 %v75, 4294901760
    %693 = vmatpush1.xpose.msra.mxu0 %v692
    %694 = vmatprep.subr.mxu0 0.0
    %v695 = vand.u32 %v72, 4294901760
    %696 = vmatpush1.xpose.msra.mxu0 %v695
    %697 = vmatprep.subr.mxu0 0.0
    %v698 = vand.u32 %v69, 4294901760
    %699 = vmatpush1.xpose.msra.mxu0 %v698
    %700 = vmatprep.subr.mxu0 0.0
    %v701 = vand.u32 %v66, 4294901760
    %702 = vmatpush1.xpose.msra.mxu0 %v701
    %703 = vmatprep.subr.mxu0 0.0
    %v704 = vand.u32 %v63, 4294901760
    %705 = vmatpush1.xpose.msra.mxu0 %v704
    %706 = vmatprep.subr.mxu0 0.0
    %v707 = vand.u32 %v60, 4294901760
    %708 = vmatpush1.xpose.msra.mxu0 %v707
    %709 = vmatprep.subr.mxu0 0.0
    %710 = vmatpush2.xpose.msra.mxu0 0.0
    %711 = vmatprep.subr.mxu0 0.0
    %712 = vmatpush2.xpose.msra.mxu0 0.0
    %713 = vmatprep.subr.mxu0 0.0
    %714 = vmatpush2.xpose.msra.mxu0 0.0
    %715 = vmatprep.subr.mxu0 0.0
    %716 = vmatpush2.xpose.msra.mxu0 0.0
    %717 = vmatprep.subr.mxu0 0.0
    %718 = vmatpush2.xpose.msra.mxu0 0.0
    %719 = vmatprep.subr.mxu0 0.0
    %720 = vmatpush2.xpose.msra.mxu0 0.0
    %721 = vmatprep.subr.mxu0 0.0
    %722 = vmatpush2.xpose.msra.mxu0 0.0
    %723 = vmatprep.subr.mxu0 0.0
    %724 = vmatpush2.xpose.msra.mxu0 0.0
    %725 = vmatprep.subr.mxu0 0.0
    %726 = vmatpush2.xpose.msra.mxu0 0.0
    %727 = vmatprep.subr.mxu0 0.0
    %728 = vmatpush2.xpose.msra.mxu0 0.0
    %729 = vmatprep.subr.mxu0 0.0
    %730 = vmatpush2.xpose.msra.mxu0 0.0
    %731 = vmatprep.subr.mxu0 0.0
    %732 = vmatpush2.xpose.msra.mxu0 0.0
    %733 = vmatprep.subr.mxu0 0.0
    %734 = vmatpush2.xpose.msra.mxu0 0.0
    %735 = vmatprep.subr.mxu0 0.0
    %736 = vmatpush2.xpose.msra.mxu0 0.0
    %737 = vmatprep.subr.mxu0 0.0
    %738 = vmatpush2.xpose.msra.mxu0 0.0
    %739 = vmatprep.subr.mxu0 0.0
    %740 = vmatpush2.xpose.msra.mxu0 0.0
    %741 = vmatprep.mubr.f32.mxu0 0.0
    %v742 = vand.u32 %v57, 4294901760
    %743 = vmatmul.mubr.f32.gmra.mxu0 %v742
    %v744 = vpop.f32.mrf.mxu0
    %v745 = vadd.f32 %v658, %v744
    %v746 = vpop.f32.mrf.mxu0
    %747 = vdwg.mxu0
    %v748 = vmul.f32 %v38, %v38
    %v749 = vmul.f32 %v39, %v39
    %v750 = vmul.f32 %v40, %v40
    %v751 = vmul.f32 %v41, %v41
    %v752 = vmul.f32 %v42, %v42
    %v753 = vmul.f32 %v43, %v43
    %v754 = vmul.f32 %v44, %v44
    %v755 = vmul.f32 %v45, %v45
    %v756 = vmul.f32 %v46, %v46
    %v757 = vmul.f32 %v47, %v47
    %v758 = vmul.f32 %v48, %v48
    %v759 = vmul.f32 %v49, %v49
    %v760 = vmul.f32 %v50, %v50
    %v761 = vmul.f32 %v51, %v51
    %v762 = vmul.f32 %v52, %v52
    %v763 = vmul.f32 %v53, %v53
    %v765 = vsel %vm55, 1.0, 0
    %v768 = vsel %vm55, %v748, 0
    %v771 = vsel %vm55, %v749, 0
    %v774 = vsel %vm55, %v750, 0
    %v777 = vsel %vm55, %v751, 0
    %v780 = vsel %vm55, %v752, 0
    %v783 = vsel %vm55, %v753, 0
    %v786 = vsel %vm55, %v754, 0
    %v789 = vsel %vm55, %v755, 0
    %v792 = vsel %vm55, %v756, 0
    %v795 = vsel %vm55, %v757, 0
    %v798 = vsel %vm55, %v758, 0
    %v801 = vsel %vm55, %v759, 0
    %v804 = vsel %vm55, %v760, 0
    %v807 = vsel %vm55, %v761, 0
    %v810 = vsel %vm55, %v762, 0
    %v813 = vsel %vm55, %v763, 0
    %815 = vmatprep.subr.mxu0 0.0
    %v816 = vand.u32 %v813, 4294901760
    %817 = vmatpush1.xpose.msra.mxu0 %v816
    %818 = vmatprep.subr.mxu0 0.0
    %v819 = vand.u32 %v810, 4294901760
    %820 = vmatpush1.xpose.msra.mxu0 %v819
    %821 = vmatprep.subr.mxu0 0.0
    %v822 = vand.u32 %v807, 4294901760
    %823 = vmatpush1.xpose.msra.mxu0 %v822
    %824 = vmatprep.subr.mxu0 0.0
    %v825 = vand.u32 %v804, 4294901760
    %826 = vmatpush1.xpose.msra.mxu0 %v825
    %827 = vmatprep.subr.mxu0 0.0
    %v828 = vand.u32 %v801, 4294901760
    %829 = vmatpush1.xpose.msra.mxu0 %v828
    %830 = vmatprep.subr.mxu0 0.0
    %v831 = vand.u32 %v798, 4294901760
    %832 = vmatpush1.xpose.msra.mxu0 %v831
    %833 = vmatprep.subr.mxu0 0.0
    %v834 = vand.u32 %v795, 4294901760
    %835 = vmatpush1.xpose.msra.mxu0 %v834
    %836 = vmatprep.subr.mxu0 0.0
    %v837 = vand.u32 %v792, 4294901760
    %838 = vmatpush1.xpose.msra.mxu0 %v837
    %839 = vmatprep.subr.mxu0 0.0
    %v840 = vand.u32 %v789, 4294901760
    %841 = vmatpush1.xpose.msra.mxu0 %v840
    %842 = vmatprep.subr.mxu0 0.0
    %v843 = vand.u32 %v786, 4294901760
    %844 = vmatpush1.xpose.msra.mxu0 %v843
    %845 = vmatprep.subr.mxu0 0.0
    %v846 = vand.u32 %v783, 4294901760
    %847 = vmatpush1.xpose.msra.mxu0 %v846
    %848 = vmatprep.subr.mxu0 0.0
    %v849 = vand.u32 %v780, 4294901760
    %850 = vmatpush1.xpose.msra.mxu0 %v849
    %851 = vmatprep.subr.mxu0 0.0
    %v852 = vand.u32 %v777, 4294901760
    %853 = vmatpush1.xpose.msra.mxu0 %v852
    %854 = vmatprep.subr.mxu0 0.0
    %v855 = vand.u32 %v774, 4294901760
    %856 = vmatpush1.xpose.msra.mxu0 %v855
    %857 = vmatprep.subr.mxu0 0.0
    %v858 = vand.u32 %v771, 4294901760
    %859 = vmatpush1.xpose.msra.mxu0 %v858
    %860 = vmatprep.subr.mxu0 0.0
    %v861 = vand.u32 %v768, 4294901760
    %862 = vmatpush1.xpose.msra.mxu0 %v861
    %863 = vmatprep.subr.mxu0 0.0
    %864 = vmatpush2.xpose.msra.mxu0 0.0
    %865 = vmatprep.subr.mxu0 0.0
    %866 = vmatpush2.xpose.msra.mxu0 0.0
    %867 = vmatprep.subr.mxu0 0.0
    %868 = vmatpush2.xpose.msra.mxu0 0.0
    %869 = vmatprep.subr.mxu0 0.0
    %870 = vmatpush2.xpose.msra.mxu0 0.0
    %871 = vmatprep.subr.mxu0 0.0
    %872 = vmatpush2.xpose.msra.mxu0 0.0
    %873 = vmatprep.subr.mxu0 0.0
    %874 = vmatpush2.xpose.msra.mxu0 0.0
    %875 = vmatprep.subr.mxu0 0.0
    %876 = vmatpush2.xpose.msra.mxu0 0.0
    %877 = vmatprep.subr.mxu0 0.0
    %878 = vmatpush2.xpose.msra.mxu0 0.0
    %879 = vmatprep.subr.mxu0 0.0
    %880 = vmatpush2.xpose.msra.mxu0 0.0
    %881 = vmatprep.subr.mxu0 0.0
    %882 = vmatpush2.xpose.msra.mxu0 0.0
    %883 = vmatprep.subr.mxu0 0.0
    %884 = vmatpush2.xpose.msra.mxu0 0.0
    %885 = vmatprep.subr.mxu0 0.0
    %886 = vmatpush2.xpose.msra.mxu0 0.0
    %887 = vmatprep.subr.mxu0 0.0
    %888 = vmatpush2.xpose.msra.mxu0 0.0
    %889 = vmatprep.subr.mxu0 0.0
    %890 = vmatpush2.xpose.msra.mxu0 0.0
    %891 = vmatprep.subr.mxu0 0.0
    %892 = vmatpush2.xpose.msra.mxu0 0.0
    %893 = vmatprep.subr.mxu0 0.0
    %894 = vmatpush2.xpose.msra.mxu0 0.0
    %895 = vmatprep.mubr.f32.mxu0 0.0
    %v896 = vand.u32 %v765, 4294901760
    %v897 = vsub.f32 %v765, %v896
    %v898 = vand.u32 %v897, 4294901760
    %v899 = vsub.f32 %v897, %v898
    %v900 = vand.u32 %v899, 4294901760
    %901 = vmatmul.mubr.f32.gmra.mxu0 %v900
    %v902 = vpop.f32.mrf.mxu0
    %v903 = vadd.f32 0.0, %v902
    %v904 = vpop.f32.mrf.mxu0
    %905 = vdwg.mxu0
    %906 = vmatprep.subr.mxu0 0.0
    %v907 = vand.u32 %v813, 4294901760
    %v908 = vsub.f32 %v813, %v907
    %v909 = vand.u32 %v908, 4294901760
    %v910 = vsub.f32 %v908, %v909
    %v911 = vand.u32 %v910, 4294901760
    %912 = vmatpush1.xpose.msra.mxu0 %v911
    %913 = vmatprep.subr.mxu0 0.0
    %v914 = vand.u32 %v810, 4294901760
    %v915 = vsub.f32 %v810, %v914
    %v916 = vand.u32 %v915, 4294901760
    %v917 = vsub.f32 %v915, %v916
    %v918 = vand.u32 %v917, 4294901760
    %919 = vmatpush1.xpose.msra.mxu0 %v918
    %920 = vmatprep.subr.mxu0 0.0
    %v921 = vand.u32 %v807, 4294901760
    %v922 = vsub.f32 %v807, %v921
    %v923 = vand.u32 %v922, 4294901760
    %v924 = vsub.f32 %v922, %v923
    %v925 = vand.u32 %v924, 4294901760
    %926 = vmatpush1.xpose.msra.mxu0 %v925
    %927 = vmatprep.subr.mxu0 0.0
    %v928 = vand.u32 %v804, 4294901760
    %v929 = vsub.f32 %v804, %v928
    %v930 = vand.u32 %v929, 4294901760
    %v931 = vsub.f32 %v929, %v930
    %v932 = vand.u32 %v931, 4294901760
    %933 = vmatpush1.xpose.msra.mxu0 %v932
    %934 = vmatprep.subr.mxu0 0.0
    %v935 = vand.u32 %v801, 4294901760
    %v936 = vsub.f32 %v801, %v935
    %v937 = vand.u32 %v936, 4294901760
    %v938 = vsub.f32 %v936, %v937
    %v939 = vand.u32 %v938, 4294901760
    %940 = vmatpush1.xpose.msra.mxu0 %v939
    %941 = vmatprep.subr.mxu0 0.0
    %v942 = vand.u32 %v798, 4294901760
    %v943 = vsub.f32 %v798, %v942
    %v944 = vand.u32 %v943, 4294901760
    %v945 = vsub.f32 %v943, %v944
    %v946 = vand.u32 %v945, 4294901760
    %947 = vmatpush1.xpose.msra.mxu0 %v946
    %948 = vmatprep.subr.mxu0 0.0
    %v949 = vand.u32 %v795, 4294901760
    %v950 = vsub.f32 %v795, %v949
    %v951 = vand.u32 %v950, 4294901760
    %v952 = vsub.f32 %v950, %v951
    %v953 = vand.u32 %v952, 4294901760
    %954 = vmatpush1.xpose.msra.mxu0 %v953
    %955 = vmatprep.subr.mxu0 0.0
    %v956 = vand.u32 %v792, 4294901760
    %v957 = vsub.f32 %v792, %v956
    %v958 = vand.u32 %v957, 4294901760
    %v959 = vsub.f32 %v957, %v958
    %v960 = vand.u32 %v959, 4294901760
    %961 = vmatpush1.xpose.msra.mxu0 %v960
    %962 = vmatprep.subr.mxu0 0.0
    %v963 = vand.u32 %v789, 4294901760
    %v964 = vsub.f32 %v789, %v963
    %v965 = vand.u32 %v964, 4294901760
    %v966 = vsub.f32 %v964, %v965
    %v967 = vand.u32 %v966, 4294901760
    %968 = vmatpush1.xpose.msra.mxu0 %v967
    %969 = vmatprep.subr.mxu0 0.0
    %v970 = vand.u32 %v786, 4294901760
    %v971 = vsub.f32 %v786, %v970
    %v972 = vand.u32 %v971, 4294901760
    %v973 = vsub.f32 %v971, %v972
    %v974 = vand.u32 %v973, 4294901760
    %975 = vmatpush1.xpose.msra.mxu0 %v974
    %976 = vmatprep.subr.mxu0 0.0
    %v977 = vand.u32 %v783, 4294901760
    %v978 = vsub.f32 %v783, %v977
    %v979 = vand.u32 %v978, 4294901760
    %v980 = vsub.f32 %v978, %v979
    %v981 = vand.u32 %v980, 4294901760
    %982 = vmatpush1.xpose.msra.mxu0 %v981
    %983 = vmatprep.subr.mxu0 0.0
    %v984 = vand.u32 %v780, 4294901760
    %v985 = vsub.f32 %v780, %v984
    %v986 = vand.u32 %v985, 4294901760
    %v987 = vsub.f32 %v985, %v986
    %v988 = vand.u32 %v987, 4294901760
    %989 = vmatpush1.xpose.msra.mxu0 %v988
    %990 = vmatprep.subr.mxu0 0.0
    %v991 = vand.u32 %v777, 4294901760
    %v992 = vsub.f32 %v777, %v991
    %v993 = vand.u32 %v992, 4294901760
    %v994 = vsub.f32 %v992, %v993
    %v995 = vand.u32 %v994, 4294901760
    %996 = vmatpush1.xpose.msra.mxu0 %v995
    %997 = vmatprep.subr.mxu0 0.0
    %v998 = vand.u32 %v774, 4294901760
    %v999 = vsub.f32 %v774, %v998
    %v1000 = vand.u32 %v999, 4294901760
    %v1001 = vsub.f32 %v999, %v1000
    %v1002 = vand.u32 %v1001, 4294901760
    %1003 = vmatpush1.xpose.msra.mxu0 %v1002
    %1004 = vmatprep.subr.mxu0 0.0
    %v1005 = vand.u32 %v771, 4294901760
    %v1006 = vsub.f32 %v771, %v1005
    %v1007 = vand.u32 %v1006, 4294901760
    %v1008 = vsub.f32 %v1006, %v1007
    %v1009 = vand.u32 %v1008, 4294901760
    %1010 = vmatpush1.xpose.msra.mxu0 %v1009
    %1011 = vmatprep.subr.mxu0 0.0
    %v1012 = vand.u32 %v768, 4294901760
    %v1013 = vsub.f32 %v768, %v1012
    %v1014 = vand.u32 %v1013, 4294901760
    %v1015 = vsub.f32 %v1013, %v1014
    %v1016 = vand.u32 %v1015, 4294901760
    %1017 = vmatpush1.xpose.msra.mxu0 %v1016
    %1018 = vmatprep.subr.mxu0 0.0
    %1019 = vmatpush2.xpose.msra.mxu0 0.0
    %1020 = vmatprep.subr.mxu0 0.0
    %1021 = vmatpush2.xpose.msra.mxu0 0.0
    %1022 = vmatprep.subr.mxu0 0.0
    %1023 = vmatpush2.xpose.msra.mxu0 0.0
    %1024 = vmatprep.subr.mxu0 0.0
    %1025 = vmatpush2.xpose.msra.mxu0 0.0
    %1026 = vmatprep.subr.mxu0 0.0
    %1027 = vmatpush2.xpose.msra.mxu0 0.0
    %1028 = vmatprep.subr.mxu0 0.0
    %1029 = vmatpush2.xpose.msra.mxu0 0.0
    %1030 = vmatprep.subr.mxu0 0.0
    %1031 = vmatpush2.xpose.msra.mxu0 0.0
    %1032 = vmatprep.subr.mxu0 0.0
    %1033 = vmatpush2.xpose.msra.mxu0 0.0
    %1034 = vmatprep.subr.mxu0 0.0
    %1035 = vmatpush2.xpose.msra.mxu0 0.0
    %1036 = vmatprep.subr.mxu0 0.0
    %1037 = vmatpush2.xpose.msra.mxu0 0.0
    %1038 = vmatprep.subr.mxu0 0.0
    %1039 = vmatpush2.xpose.msra.mxu0 0.0
    %1040 = vmatprep.subr.mxu0 0.0
    %1041 = vmatpush2.xpose.msra.mxu0 0.0
    %1042 = vmatprep.subr.mxu0 0.0
    %1043 = vmatpush2.xpose.msra.mxu0 0.0
    %1044 = vmatprep.subr.mxu0 0.0
    %1045 = vmatpush2.xpose.msra.mxu0 0.0
    %1046 = vmatprep.subr.mxu0 0.0
    %1047 = vmatpush2.xpose.msra.mxu0 0.0
    %1048 = vmatprep.subr.mxu0 0.0
    %1049 = vmatpush2.xpose.msra.mxu0 0.0
    %1050 = vmatprep.mubr.f32.mxu0 0.0
    %v1051 = vand.u32 %v765, 4294901760
    %1052 = vmatmul.mubr.f32.gmra.mxu0 %v1051
    %v1053 = vpop.f32.mrf.mxu0
    %v1054 = vadd.f32 %v903, %v1053
    %v1055 = vpop.f32.mrf.mxu0
    %1056 = vdwg.mxu0
    %1057 = vmatprep.subr.mxu0 0.0
    %v1058 = vand.u32 %v813, 4294901760
    %v1059 = vsub.f32 %v813, %v1058
    %1060 = vmatpush1.xpose.msra.mxu0 %v1059
    %1061 = vmatprep.subr.mxu0 0.0
    %v1062 = vand.u32 %v810, 4294901760
    %v1063 = vsub.f32 %v810, %v1062
    %1064 = vmatpush1.xpose.msra.mxu0 %v1063
    %1065 = vmatprep.subr.mxu0 0.0
    %v1066 = vand.u32 %v807, 4294901760
    %v1067 = vsub.f32 %v807, %v1066
    %1068 = vmatpush1.xpose.msra.mxu0 %v1067
    %1069 = vmatprep.subr.mxu0 0.0
    %v1070 = vand.u32 %v804, 4294901760
    %v1071 = vsub.f32 %v804, %v1070
    %1072 = vmatpush1.xpose.msra.mxu0 %v1071
    %1073 = vmatprep.subr.mxu0 0.0
    %v1074 = vand.u32 %v801, 4294901760
    %v1075 = vsub.f32 %v801, %v1074
    %1076 = vmatpush1.xpose.msra.mxu0 %v1075
    %1077 = vmatprep.subr.mxu0 0.0
    %v1078 = vand.u32 %v798, 4294901760
    %v1079 = vsub.f32 %v798, %v1078
    %1080 = vmatpush1.xpose.msra.mxu0 %v1079
    %1081 = vmatprep.subr.mxu0 0.0
    %v1082 = vand.u32 %v795, 4294901760
    %v1083 = vsub.f32 %v795, %v1082
    %1084 = vmatpush1.xpose.msra.mxu0 %v1083
    %1085 = vmatprep.subr.mxu0 0.0
    %v1086 = vand.u32 %v792, 4294901760
    %v1087 = vsub.f32 %v792, %v1086
    %1088 = vmatpush1.xpose.msra.mxu0 %v1087
    %1089 = vmatprep.subr.mxu0 0.0
    %v1090 = vand.u32 %v789, 4294901760
    %v1091 = vsub.f32 %v789, %v1090
    %1092 = vmatpush1.xpose.msra.mxu0 %v1091
    %1093 = vmatprep.subr.mxu0 0.0
    %v1094 = vand.u32 %v786, 4294901760
    %v1095 = vsub.f32 %v786, %v1094
    %1096 = vmatpush1.xpose.msra.mxu0 %v1095
    %1097 = vmatprep.subr.mxu0 0.0
    %v1098 = vand.u32 %v783, 4294901760
    %v1099 = vsub.f32 %v783, %v1098
    %1100 = vmatpush1.xpose.msra.mxu0 %v1099
    %1101 = vmatprep.subr.mxu0 0.0
    %v1102 = vand.u32 %v780, 4294901760
    %v1103 = vsub.f32 %v780, %v1102
    %1104 = vmatpush1.xpose.msra.mxu0 %v1103
    %1105 = vmatprep.subr.mxu0 0.0
    %v1106 = vand.u32 %v777, 4294901760
    %v1107 = vsub.f32 %v777, %v1106
    %1108 = vmatpush1.xpose.msra.mxu0 %v1107
    %1109 = vmatprep.subr.mxu0 0.0
    %v1110 = vand.u32 %v774, 4294901760
    %v1111 = vsub.f32 %v774, %v1110
    %1112 = vmatpush1.xpose.msra.mxu0 %v1111
    %1113 = vmatprep.subr.mxu0 0.0
    %v1114 = vand.u32 %v771, 4294901760
    %v1115 = vsub.f32 %v771, %v1114
    %1116 = vmatpush1.xpose.msra.mxu0 %v1115
    %1117 = vmatprep.subr.mxu0 0.0
    %v1118 = vand.u32 %v768, 4294901760
    %v1119 = vsub.f32 %v768, %v1118
    %1120 = vmatpush1.xpose.msra.mxu0 %v1119
    %1121 = vmatprep.subr.mxu0 0.0
    %1122 = vmatpush2.xpose.msra.mxu0 0.0
    %1123 = vmatprep.subr.mxu0 0.0
    %1124 = vmatpush2.xpose.msra.mxu0 0.0
    %1125 = vmatprep.subr.mxu0 0.0
    %1126 = vmatpush2.xpose.msra.mxu0 0.0
    %1127 = vmatprep.subr.mxu0 0.0
    %1128 = vmatpush2.xpose.msra.mxu0 0.0
    %1129 = vmatprep.subr.mxu0 0.0
    %1130 = vmatpush2.xpose.msra.mxu0 0.0
    %1131 = vmatprep.subr.mxu0 0.0
    %1132 = vmatpush2.xpose.msra.mxu0 0.0
    %1133 = vmatprep.subr.mxu0 0.0
    %1134 = vmatpush2.xpose.msra.mxu0 0.0
    %1135 = vmatprep.subr.mxu0 0.0
    %1136 = vmatpush2.xpose.msra.mxu0 0.0
    %1137 = vmatprep.subr.mxu0 0.0
    %1138 = vmatpush2.xpose.msra.mxu0 0.0
    %1139 = vmatprep.subr.mxu0 0.0
    %1140 = vmatpush2.xpose.msra.mxu0 0.0
    %1141 = vmatprep.subr.mxu0 0.0
    %1142 = vmatpush2.xpose.msra.mxu0 0.0
    %1143 = vmatprep.subr.mxu0 0.0
    %1144 = vmatpush2.xpose.msra.mxu0 0.0
    %1145 = vmatprep.subr.mxu0 0.0
    %1146 = vmatpush2.xpose.msra.mxu0 0.0
    %1147 = vmatprep.subr.mxu0 0.0
    %1148 = vmatpush2.xpose.msra.mxu0 0.0
    %1149 = vmatprep.subr.mxu0 0.0
    %1150 = vmatpush2.xpose.msra.mxu0 0.0
    %1151 = vmatprep.subr.mxu0 0.0
    %1152 = vmatpush2.xpose.msra.mxu0 0.0
    %1153 = vmatprep.mubr.f32.mxu0 0.0
    %v1154 = vand.u32 %v765, 4294901760
    %v1155 = vsub.f32 %v765, %v1154
    %1156 = vmatmul.mubr.f32.gmra.mxu0 %v1155
    %v1157 = vpop.f32.mrf.mxu0
    %v1158 = vadd.f32 %v1054, %v1157
    %v1159 = vpop.f32.mrf.mxu0
    %1160 = vdwg.mxu0
    %1161 = vmatprep.subr.mxu0 0.0
    %v1162 = vand.u32 %v813, 4294901760
    %1163 = vmatpush1.xpose.msra.mxu0 %v1162
    %1164 = vmatprep.subr.mxu0 0.0
    %v1165 = vand.u32 %v810, 4294901760
    %1166 = vmatpush1.xpose.msra.mxu0 %v1165
    %1167 = vmatprep.subr.mxu0 0.0
    %v1168 = vand.u32 %v807, 4294901760
    %1169 = vmatpush1.xpose.msra.mxu0 %v1168
    %1170 = vmatprep.subr.mxu0 0.0
    %v1171 = vand.u32 %v804, 4294901760
    %1172 = vmatpush1.xpose.msra.mxu0 %v1171
    %1173 = vmatprep.subr.mxu0 0.0
    %v1174 = vand.u32 %v801, 4294901760
    %1175 = vmatpush1.xpose.msra.mxu0 %v1174
    %1176 = vmatprep.subr.mxu0 0.0
    %v1177 = vand.u32 %v798, 4294901760
    %1178 = vmatpush1.xpose.msra.mxu0 %v1177
    %1179 = vmatprep.subr.mxu0 0.0
    %v1180 = vand.u32 %v795, 4294901760
    %1181 = vmatpush1.xpose.msra.mxu0 %v1180
    %1182 = vmatprep.subr.mxu0 0.0
    %v1183 = vand.u32 %v792, 4294901760
    %1184 = vmatpush1.xpose.msra.mxu0 %v1183
    %1185 = vmatprep.subr.mxu0 0.0
    %v1186 = vand.u32 %v789, 4294901760
    %1187 = vmatpush1.xpose.msra.mxu0 %v1186
    %1188 = vmatprep.subr.mxu0 0.0
    %v1189 = vand.u32 %v786, 4294901760
    %1190 = vmatpush1.xpose.msra.mxu0 %v1189
    %1191 = vmatprep.subr.mxu0 0.0
    %v1192 = vand.u32 %v783, 4294901760
    %1193 = vmatpush1.xpose.msra.mxu0 %v1192
    %1194 = vmatprep.subr.mxu0 0.0
    %v1195 = vand.u32 %v780, 4294901760
    %1196 = vmatpush1.xpose.msra.mxu0 %v1195
    %1197 = vmatprep.subr.mxu0 0.0
    %v1198 = vand.u32 %v777, 4294901760
    %1199 = vmatpush1.xpose.msra.mxu0 %v1198
    %1200 = vmatprep.subr.mxu0 0.0
    %v1201 = vand.u32 %v774, 4294901760
    %1202 = vmatpush1.xpose.msra.mxu0 %v1201
    %1203 = vmatprep.subr.mxu0 0.0
    %v1204 = vand.u32 %v771, 4294901760
    %1205 = vmatpush1.xpose.msra.mxu0 %v1204
    %1206 = vmatprep.subr.mxu0 0.0
    %v1207 = vand.u32 %v768, 4294901760
    %1208 = vmatpush1.xpose.msra.mxu0 %v1207
    %1209 = vmatprep.subr.mxu0 0.0
    %1210 = vmatpush2.xpose.msra.mxu0 0.0
    %1211 = vmatprep.subr.mxu0 0.0
    %1212 = vmatpush2.xpose.msra.mxu0 0.0
    %1213 = vmatprep.subr.mxu0 0.0
    %1214 = vmatpush2.xpose.msra.mxu0 0.0
    %1215 = vmatprep.subr.mxu0 0.0
    %1216 = vmatpush2.xpose.msra.mxu0 0.0
    %1217 = vmatprep.subr.mxu0 0.0
    %1218 = vmatpush2.xpose.msra.mxu0 0.0
    %1219 = vmatprep.subr.mxu0 0.0
    %1220 = vmatpush2.xpose.msra.mxu0 0.0
    %1221 = vmatprep.subr.mxu0 0.0
    %1222 = vmatpush2.xpose.msra.mxu0 0.0
    %1223 = vmatprep.subr.mxu0 0.0
    %1224 = vmatpush2.xpose.msra.mxu0 0.0
    %1225 = vmatprep.subr.mxu0 0.0
    %1226 = vmatpush2.xpose.msra.mxu0 0.0
    %1227 = vmatprep.subr.mxu0 0.0
    %1228 = vmatpush2.xpose.msra.mxu0 0.0
    %1229 = vmatprep.subr.mxu0 0.0
    %1230 = vmatpush2.xpose.msra.mxu0 0.0
    %1231 = vmatprep.subr.mxu0 0.0
    %1232 = vmatpush2.xpose.msra.mxu0 0.0
    %1233 = vmatprep.subr.mxu0 0.0
    %1234 = vmatpush2.xpose.msra.mxu0 0.0
    %1235 = vmatprep.subr.mxu0 0.0
    %1236 = vmatpush2.xpose.msra.mxu0 0.0
    %1237 = vmatprep.subr.mxu0 0.0
    %1238 = vmatpush2.xpose.msra.mxu0 0.0
    %1239 = vmatprep.subr.mxu0 0.0
    %1240 = vmatpush2.xpose.msra.mxu0 0.0
    %1241 = vmatprep.mubr.f32.mxu0 0.0
    %v1242 = vand.u32 %v765, 4294901760
    %v1243 = vsub.f32 %v765, %v1242
    %v1244 = vand.u32 %v1243, 4294901760
    %1245 = vmatmul.mubr.f32.gmra.mxu0 %v1244
    %v1246 = vpop.f32.mrf.mxu0
    %v1247 = vadd.f32 %v1158, %v1246
    %v1248 = vpop.f32.mrf.mxu0
    %1249 = vdwg.mxu0
    %1250 = vmatprep.subr.mxu0 0.0
    %v1251 = vand.u32 %v813, 4294901760
    %v1252 = vsub.f32 %v813, %v1251
    %v1253 = vand.u32 %v1252, 4294901760
    %1254 = vmatpush1.xpose.msra.mxu0 %v1253
    %1255 = vmatprep.subr.mxu0 0.0
    %v1256 = vand.u32 %v810, 4294901760
    %v1257 = vsub.f32 %v810, %v1256
    %v1258 = vand.u32 %v1257, 4294901760
    %1259 = vmatpush1.xpose.msra.mxu0 %v1258
    %1260 = vmatprep.subr.mxu0 0.0
    %v1261 = vand.u32 %v807, 4294901760
    %v1262 = vsub.f32 %v807, %v1261
    %v1263 = vand.u32 %v1262, 4294901760
    %1264 = vmatpush1.xpose.msra.mxu0 %v1263
    %1265 = vmatprep.subr.mxu0 0.0
    %v1266 = vand.u32 %v804, 4294901760
    %v1267 = vsub.f32 %v804, %v1266
    %v1268 = vand.u32 %v1267, 4294901760
    %1269 = vmatpush1.xpose.msra.mxu0 %v1268
    %1270 = vmatprep.subr.mxu0 0.0
    %v1271 = vand.u32 %v801, 4294901760
    %v1272 = vsub.f32 %v801, %v1271
    %v1273 = vand.u32 %v1272, 4294901760
    %1274 = vmatpush1.xpose.msra.mxu0 %v1273
    %1275 = vmatprep.subr.mxu0 0.0
    %v1276 = vand.u32 %v798, 4294901760
    %v1277 = vsub.f32 %v798, %v1276
    %v1278 = vand.u32 %v1277, 4294901760
    %1279 = vmatpush1.xpose.msra.mxu0 %v1278
    %1280 = vmatprep.subr.mxu0 0.0
    %v1281 = vand.u32 %v795, 4294901760
    %v1282 = vsub.f32 %v795, %v1281
    %v1283 = vand.u32 %v1282, 4294901760
    %1284 = vmatpush1.xpose.msra.mxu0 %v1283
    %1285 = vmatprep.subr.mxu0 0.0
    %v1286 = vand.u32 %v792, 4294901760
    %v1287 = vsub.f32 %v792, %v1286
    %v1288 = vand.u32 %v1287, 4294901760
    %1289 = vmatpush1.xpose.msra.mxu0 %v1288
    %1290 = vmatprep.subr.mxu0 0.0
    %v1291 = vand.u32 %v789, 4294901760
    %v1292 = vsub.f32 %v789, %v1291
    %v1293 = vand.u32 %v1292, 4294901760
    %1294 = vmatpush1.xpose.msra.mxu0 %v1293
    %1295 = vmatprep.subr.mxu0 0.0
    %v1296 = vand.u32 %v786, 4294901760
    %v1297 = vsub.f32 %v786, %v1296
    %v1298 = vand.u32 %v1297, 4294901760
    %1299 = vmatpush1.xpose.msra.mxu0 %v1298
    %1300 = vmatprep.subr.mxu0 0.0
    %v1301 = vand.u32 %v783, 4294901760
    %v1302 = vsub.f32 %v783, %v1301
    %v1303 = vand.u32 %v1302, 4294901760
    %1304 = vmatpush1.xpose.msra.mxu0 %v1303
    %1305 = vmatprep.subr.mxu0 0.0
    %v1306 = vand.u32 %v780, 4294901760
    %v1307 = vsub.f32 %v780, %v1306
    %v1308 = vand.u32 %v1307, 4294901760
    %1309 = vmatpush1.xpose.msra.mxu0 %v1308
    %1310 = vmatprep.subr.mxu0 0.0
    %v1311 = vand.u32 %v777, 4294901760
    %v1312 = vsub.f32 %v777, %v1311
    %v1313 = vand.u32 %v1312, 4294901760
    %1314 = vmatpush1.xpose.msra.mxu0 %v1313
    %1315 = vmatprep.subr.mxu0 0.0
    %v1316 = vand.u32 %v774, 4294901760
    %v1317 = vsub.f32 %v774, %v1316
    %v1318 = vand.u32 %v1317, 4294901760
    %1319 = vmatpush1.xpose.msra.mxu0 %v1318
    %1320 = vmatprep.subr.mxu0 0.0
    %v1321 = vand.u32 %v771, 4294901760
    %v1322 = vsub.f32 %v771, %v1321
    %v1323 = vand.u32 %v1322, 4294901760
    %1324 = vmatpush1.xpose.msra.mxu0 %v1323
    %1325 = vmatprep.subr.mxu0 0.0
    %v1326 = vand.u32 %v768, 4294901760
    %v1327 = vsub.f32 %v768, %v1326
    %v1328 = vand.u32 %v1327, 4294901760
    %1329 = vmatpush1.xpose.msra.mxu0 %v1328
    %1330 = vmatprep.subr.mxu0 0.0
    %1331 = vmatpush2.xpose.msra.mxu0 0.0
    %1332 = vmatprep.subr.mxu0 0.0
    %1333 = vmatpush2.xpose.msra.mxu0 0.0
    %1334 = vmatprep.subr.mxu0 0.0
    %1335 = vmatpush2.xpose.msra.mxu0 0.0
    %1336 = vmatprep.subr.mxu0 0.0
    %1337 = vmatpush2.xpose.msra.mxu0 0.0
    %1338 = vmatprep.subr.mxu0 0.0
    %1339 = vmatpush2.xpose.msra.mxu0 0.0
    %1340 = vmatprep.subr.mxu0 0.0
    %1341 = vmatpush2.xpose.msra.mxu0 0.0
    %1342 = vmatprep.subr.mxu0 0.0
    %1343 = vmatpush2.xpose.msra.mxu0 0.0
    %1344 = vmatprep.subr.mxu0 0.0
    %1345 = vmatpush2.xpose.msra.mxu0 0.0
    %1346 = vmatprep.subr.mxu0 0.0
    %1347 = vmatpush2.xpose.msra.mxu0 0.0
    %1348 = vmatprep.subr.mxu0 0.0
    %1349 = vmatpush2.xpose.msra.mxu0 0.0
    %1350 = vmatprep.subr.mxu0 0.0
    %1351 = vmatpush2.xpose.msra.mxu0 0.0
    %1352 = vmatprep.subr.mxu0 0.0
    %1353 = vmatpush2.xpose.msra.mxu0 0.0
    %1354 = vmatprep.subr.mxu0 0.0
    %1355 = vmatpush2.xpose.msra.mxu0 0.0
    %1356 = vmatprep.subr.mxu0 0.0
    %1357 = vmatpush2.xpose.msra.mxu0 0.0
    %1358 = vmatprep.subr.mxu0 0.0
    %1359 = vmatpush2.xpose.msra.mxu0 0.0
    %1360 = vmatprep.subr.mxu0 0.0
    %1361 = vmatpush2.xpose.msra.mxu0 0.0
    %1362 = vmatprep.mubr.f32.mxu0 0.0
    %v1363 = vand.u32 %v765, 4294901760
    %1364 = vmatmul.mubr.f32.gmra.mxu0 %v1363
    %v1365 = vpop.f32.mrf.mxu0
    %v1366 = vadd.f32 %v1247, %v1365
    %v1367 = vpop.f32.mrf.mxu0
    %1368 = vdwg.mxu0
    %1369 = vmatprep.subr.mxu0 0.0
    %v1370 = vand.u32 %v813, 4294901760
    %1371 = vmatpush1.xpose.msra.mxu0 %v1370
    %1372 = vmatprep.subr.mxu0 0.0
    %v1373 = vand.u32 %v810, 4294901760
    %1374 = vmatpush1.xpose.msra.mxu0 %v1373
    %1375 = vmatprep.subr.mxu0 0.0
    %v1376 = vand.u32 %v807, 4294901760
    %1377 = vmatpush1.xpose.msra.mxu0 %v1376
    %1378 = vmatprep.subr.mxu0 0.0
    %v1379 = vand.u32 %v804, 4294901760
    %1380 = vmatpush1.xpose.msra.mxu0 %v1379
    %1381 = vmatprep.subr.mxu0 0.0
    %v1382 = vand.u32 %v801, 4294901760
    %1383 = vmatpush1.xpose.msra.mxu0 %v1382
    %1384 = vmatprep.subr.mxu0 0.0
    %v1385 = vand.u32 %v798, 4294901760
    %1386 = vmatpush1.xpose.msra.mxu0 %v1385
    %1387 = vmatprep.subr.mxu0 0.0
    %v1388 = vand.u32 %v795, 4294901760
    %1389 = vmatpush1.xpose.msra.mxu0 %v1388
    %1390 = vmatprep.subr.mxu0 0.0
    %v1391 = vand.u32 %v792, 4294901760
    %1392 = vmatpush1.xpose.msra.mxu0 %v1391
    %1393 = vmatprep.subr.mxu0 0.0
    %v1394 = vand.u32 %v789, 4294901760
    %1395 = vmatpush1.xpose.msra.mxu0 %v1394
    %1396 = vmatprep.subr.mxu0 0.0
    %v1397 = vand.u32 %v786, 4294901760
    %1398 = vmatpush1.xpose.msra.mxu0 %v1397
    %1399 = vmatprep.subr.mxu0 0.0
    %v1400 = vand.u32 %v783, 4294901760
    %1401 = vmatpush1.xpose.msra.mxu0 %v1400
    %1402 = vmatprep.subr.mxu0 0.0
    %v1403 = vand.u32 %v780, 4294901760
    %1404 = vmatpush1.xpose.msra.mxu0 %v1403
    %1405 = vmatprep.subr.mxu0 0.0
    %v1406 = vand.u32 %v777, 4294901760
    %1407 = vmatpush1.xpose.msra.mxu0 %v1406
    %1408 = vmatprep.subr.mxu0 0.0
    %v1409 = vand.u32 %v774, 4294901760
    %1410 = vmatpush1.xpose.msra.mxu0 %v1409
    %1411 = vmatprep.subr.mxu0 0.0
    %v1412 = vand.u32 %v771, 4294901760
    %1413 = vmatpush1.xpose.msra.mxu0 %v1412
    %1414 = vmatprep.subr.mxu0 0.0
    %v1415 = vand.u32 %v768, 4294901760
    %1416 = vmatpush1.xpose.msra.mxu0 %v1415
    %1417 = vmatprep.subr.mxu0 0.0
    %1418 = vmatpush2.xpose.msra.mxu0 0.0
    %1419 = vmatprep.subr.mxu0 0.0
    %1420 = vmatpush2.xpose.msra.mxu0 0.0
    %1421 = vmatprep.subr.mxu0 0.0
    %1422 = vmatpush2.xpose.msra.mxu0 0.0
    %1423 = vmatprep.subr.mxu0 0.0
    %1424 = vmatpush2.xpose.msra.mxu0 0.0
    %1425 = vmatprep.subr.mxu0 0.0
    %1426 = vmatpush2.xpose.msra.mxu0 0.0
    %1427 = vmatprep.subr.mxu0 0.0
    %1428 = vmatpush2.xpose.msra.mxu0 0.0
    %1429 = vmatprep.subr.mxu0 0.0
    %1430 = vmatpush2.xpose.msra.mxu0 0.0
    %1431 = vmatprep.subr.mxu0 0.0
    %1432 = vmatpush2.xpose.msra.mxu0 0.0
    %1433 = vmatprep.subr.mxu0 0.0
    %1434 = vmatpush2.xpose.msra.mxu0 0.0
    %1435 = vmatprep.subr.mxu0 0.0
    %1436 = vmatpush2.xpose.msra.mxu0 0.0
    %1437 = vmatprep.subr.mxu0 0.0
    %1438 = vmatpush2.xpose.msra.mxu0 0.0
    %1439 = vmatprep.subr.mxu0 0.0
    %1440 = vmatpush2.xpose.msra.mxu0 0.0
    %1441 = vmatprep.subr.mxu0 0.0
    %1442 = vmatpush2.xpose.msra.mxu0 0.0
    %1443 = vmatprep.subr.mxu0 0.0
    %1444 = vmatpush2.xpose.msra.mxu0 0.0
    %1445 = vmatprep.subr.mxu0 0.0
    %1446 = vmatpush2.xpose.msra.mxu0 0.0
    %1447 = vmatprep.subr.mxu0 0.0
    %1448 = vmatpush2.xpose.msra.mxu0 0.0
    %1449 = vmatprep.mubr.f32.mxu0 0.0
    %v1450 = vand.u32 %v765, 4294901760
    %1451 = vmatmul.mubr.f32.gmra.mxu0 %v1450
    %v1452 = vpop.f32.mrf.mxu0
    %v1453 = vadd.f32 %v1366, %v1452
    %v1454 = vpop.f32.mrf.mxu0
    %1455 = vdwg.mxu0
    %v1456 = vmul.f32 %v54, %v54
    %vm1457 = vcmask 517120
    %v1458 = vsel %vm1457, %v1456, 0.0
    %1459 = vadd.xlane.f32.xlu0 %v1458
    %v1460 = vpop.xlane.xlu0 %1459
    %v1461 = vlaneseq
    %v1462 = vshrl.u32 %v1461, 7
    %v1463 = vsub.s32 0, %v1462
    %v1464 = vrot.slane %v1453, %v1463
    %v1465 = vadd.f32 %v1464, %v1460
    %v1466 = vmul.f32 %v745, 2.0
    %v1467 = vsub.f32 %v1465, %v1466
    %v1468 = vmax.f32 %v1467, 0.0
    %v1469 = vadd.f32 %v1468, 1.0
    %v1470 = vrcp.pop %v1469
    %v1471 = vmul.f32 1.0, %v1470
    %vm1472 = vcmask 1041408
    %v1473 = vsel %vm1472, %v1471, 0.0
    %v1474 = vrot.slane %v1473, 4
    %v1475 = vadd.f32 %v1473, %v1474
    %v1476 = vrot.slane %v1475, 2
    %v1477 = vadd.f32 %v1475, %v1476
    %v1478 = vrot.slane %v1477, 1
    %v1479 = vadd.f32 %v1477, %v1478
    %v1480 = vrcp.pop %v1479
    %v1481 = vmul.f32 %v1471, %v1480
    %1482 = vst [vmem:[#allocation7] sm:$0x3] %v1481
    // Predicated region
    $region18: #{tpu_custom_call.1} parent=1 // pred_check
      _
    $region19: #{tpu_custom_call.1} parent=1 // pred_check_branch
      %1484 = sbr.rel (0) target = $region21
    $region20: #{tpu_custom_call.1} parent=1 // pred_region
      %s1486 = ssub.s32 32, 32
      %1487 = vsyncadd [#allocation4], %s1486
      %s1489 = sshll.u32 [#allocation7], 4
      %s1490 = int_to_ptr.vmem [resolvable:$true] %s1489
      %1492 = dma.vmem_to_hbm [thread:$0]  %s1490, 32, %s2, [#allocation4]
    $region21: #{tpu_custom_call.1} parent=1 // pred_fallthru
      _
    // Predicated region
    $region22: #{tpu_custom_call.1} parent=1 // pred_check
      _
    $region23: #{tpu_custom_call.1} parent=1 // pred_check_branch
      %1494 = sbr.rel (0) target = $region25
    $region24: #{tpu_custom_call.1} parent=1 // pred_region
      %1495 = dma.done [#allocation4], 32
    $region25: #{tpu_custom_call.1} parent=1 // pred_fallthru
      _
    %1496 = vsyncpa [#allocation3], 1
    %1497 = vsyncpa [#allocation6], 1
    %1498 = vsyncpa [#allocation4], 1

</llo_original>
